<compile_context>
chip_gen: v6e
topology: v6e:2x2x1
jax: 0.10.0
libtpu: 0.0.40
codegen_flags: <defaults>
</compile_context>

<pallas_src>
import functools

import jax
import jax.numpy as jnp
from jax import lax
from jax.experimental import pallas as pl
from jax.experimental.pallas import tpu as pltpu

NUM_CLASSES = 21
FEA_DIM = 512
MARGIN = 1.0
NEG_C2C_MARGIN = 1.4

CLASS_PAD = 128                      # lane-dense class axis
_BIG = 1e30                          # finite sentinel for masked reductions
_NT = (((1,), (1,)), ((), ()))       # "A @ B.T" dot_general dimension numbers


def _round_up(a, m):
    return (a + m - 1) // m * m


# --------------------------------------------------------------------------
# Kernel 1: center-side precompute (runs once per loss call, O(Cp^2 * D)).
# --------------------------------------------------------------------------
def center_prep_kernel(centers_ref, nc_ref, negc2c_ref, *, num_valid):
    # centers_ref: (Cp, D) f32, rows >= num_valid are zero padding.
    centers = centers_ref[...]                                      # (Cp, D)
    Cp = centers.shape[0]

    # F.normalize(dim=1, eps=1e-12):  1/max(||c||,1e-12) == rsqrt(max(||c||^2,1e-24)).
    sq = jnp.sum(centers * centers, axis=1, keepdims=True)          # (Cp, 1)
    inv_norm = lax.rsqrt(jnp.maximum(sq, 1e-24))                    # EUP
    nc = centers * inv_norm                                         # (Cp, D); pad rows stay 0
    nc_ref[...] = nc

    # c2cT[j, k] = <nc[j], centers[k]>  (raw center anchor vs normalized center,
    # exactly as in the PyTorch code).  Anchors on the lane axis so the reduction
    # below lands the result directly in (1, Cp) layout.
    c2cT = lax.dot_general(nc, centers, _NT,
                           preferred_element_type=jnp.float32)      # (Cp, Cp)
    j_ids = lax.broadcasted_iota(jnp.int32, (Cp, Cp), 0)            # "other" class j
    k_ids = lax.broadcasted_iota(jnp.int32, (Cp, Cp), 1)            # anchor class k
    neg_mask = jnp.logical_and(j_ids != k_ids, j_ids < num_valid)
    # neg_c2c_pc[k] = 1 - max_{j!=k, j<C} c2cT[j, k]
    negc2c_ref[...] = 1.0 - jnp.max(jnp.where(neg_mask, c2cT, -_BIG),
                                    axis=0, keepdims=True)          # (1, Cp)


# --------------------------------------------------------------------------
# Kernel 2: batch path, grid over B blocks of TB rows.
# --------------------------------------------------------------------------
def tc_loss_kernel(labels_ref, x_ref, nc_ref, negc2c_ref, out_ref, *,
                   num_valid, batch_valid):
    # labels_ref: (TB, 1) int32 | x_ref: (TB, D) f32 (rows L2-normalized)
    # nc_ref:     (Cp, D) f32 resident | negc2c_ref: (1, Cp) f32 resident
    x = x_ref[...]
    labels = labels_ref[...]
    nc = nc_ref[...]
    negc2c_pc = negc2c_ref[...]
    TB = x.shape[0]
    Cp = nc.shape[0]

    # Cosine similarity of every sample with every normalized center ("NT" -> MXU).
    x_sim = lax.dot_general(x, nc, _NT,
                            preferred_element_type=jnp.float32)     # (TB, Cp)

    class_ids = lax.broadcasted_iota(jnp.int32, (TB, Cp), 1)
    label_mask = class_ids == labels                                 # (TB, Cp)
    valid_mask = class_ids < num_valid
    neg_mask = jnp.logical_and(jnp.logical_not(label_mask), valid_mask)

    # pos_i   = 1 - <x_i, nc[label_i]>
    # neg_i   = min_{j!=label_i, j<C} (1 - <x_i, nc[j]>) = 1 - max(masked x_sim)
    # negc2c_i= neg_c2c_pc[label_i]  (hoisted per-class precompute, gathered here)
    pos = 1.0 - jnp.sum(jnp.where(label_mask, x_sim, 0.0),
                        axis=1, keepdims=True)                       # (TB, 1)
    neg = 1.0 - jnp.max(jnp.where(neg_mask, x_sim, -_BIG),
                        axis=1, keepdims=True)                       # (TB, 1)
    neg_c2c = jnp.sum(jnp.where(label_mask, negc2c_pc, 0.0),
                      axis=1, keepdims=True)                         # (TB, 1)

    hinge = (jnp.maximum(pos + MARGIN - neg, 0.0)
             + jnp.maximum(NEG_C2C_MARGIN - neg_c2c, 0.0))           # (TB, 1)

    # Zero the batch-padding rows so the wrapper-side sum is exact.
    row_ids = (lax.broadcasted_iota(jnp.int32, (TB, 1), 0)
               + pl.program_id(0) * TB)
    out_ref[...] = jnp.where(row_ids < batch_valid, hinge, 0.0)


# --------------------------------------------------------------------------
# Wrapper
# --------------------------------------------------------------------------
def triplet_center_cosine_rf_loss(x, labels, centers_padded, num_classes=NUM_CLASSES):
    """x: (B, D) f32 with ||x_i||=1, labels: (B,) int,
    centers_padded: (CLASS_PAD, D) f32 (rows >= num_classes are zero) -> scalar f32."""
    B, D = x.shape
    Cp = centers_padded.shape[0]

    # ---- center-side precompute (one tiny pallas_call, independent of B) ----
    norm_centers, neg_c2c_pc = pl.pallas_call(
        functools.partial(center_prep_kernel, num_valid=num_classes),
        out_shape=(jax.ShapeDtypeStruct((Cp, D), jnp.float32),
                   jax.ShapeDtypeStruct((1, Cp), jnp.float32)),
        in_specs=[pl.BlockSpec(memory_space=pltpu.MemorySpace.VMEM)],
        out_specs=(pl.BlockSpec(memory_space=pltpu.MemorySpace.VMEM),
                   pl.BlockSpec(memory_space=pltpu.MemorySpace.VMEM)),
    )(centers_padded)

    # ---- batch tiling: TB=256 fills the v6e/v7x MXU; small B -> multiple of 8 ----
    # Per-step VMEM footprint ~ 2*TB*D*4 + 256 KiB centers, well under v7x's limit.
    tb = 256 if B >= 256 else _round_up(B, 8)
    b_pad = _round_up(B, tb)
    labels_i32 = labels.astype(jnp.int32).reshape(B, 1)
    if b_pad != B:
        x_p = jnp.zeros((b_pad, D), x.dtype).at[:B].set(x)
        labels_p = jnp.zeros((b_pad, 1), jnp.int32).at[:B].set(labels_i32)
    else:
        x_p, labels_p = x, labels_i32

    num_blocks = b_pad // tb
    hinge = pl.pallas_call(
        functools.partial(tc_loss_kernel, num_valid=num_classes, batch_valid=B),
        grid=(num_blocks,),
        out_shape=jax.ShapeDtypeStruct((b_pad, 1), jnp.float32),
        in_specs=[
            pl.BlockSpec((tb, 1), lambda i: (i, 0)),     # labels block
            pl.BlockSpec((tb, D), lambda i: (i, 0)),     # x block (pipelined DMA)
            pl.BlockSpec((Cp, D), lambda i: (0, 0)),     # norm_centers: resident
            pl.BlockSpec((1, Cp), lambda i: (0, 0)),     # per-class neg_c2c: resident
        ],
        out_specs=pl.BlockSpec((tb, 1), lambda i: (i, 0)),
        compiler_params=pltpu.CompilerParams(
            dimension_semantics=("parallel",)),           # v7x: shard B blocks across TCs
    )(labels_p, x_p, norm_centers, neg_c2c_pc)

    # Per-block partial (per-sample) results; final reduction in the wrapper.
    return jnp.sum(hinge) / jnp.float32(B)
    # TODO(synk): optionally cast x / norm_centers to bf16 for the x_sim matmul
    # (f32 accumulation) if training precision allows -- ~3-6x MXU throughput.


# --------------------------------------------------------------------------
# Pure-JAX reference mirroring the PyTorch forward (per-sample loop).
# --------------------------------------------------------------------------
def reference_loss(x, labels, centers):
    norm_centers = centers / jnp.maximum(
        jnp.linalg.norm(centers, axis=1, keepdims=True), 1e-12)
    B, _ = x.shape
    C = centers.shape[0]
    total = jnp.float32(0.0)
    for i in range(B):
        lab = int(labels[i])
        pos = 1.0 - jnp.dot(x[i], norm_centers[lab])
        mask = jnp.arange(C) != lab
        neg = jnp.min(jnp.where(mask, 1.0 - x[i] @ norm_centers.T, jnp.inf))
        negc2c = jnp.min(
            jnp.where(mask, 1.0 - centers[lab] @ norm_centers.T, jnp.inf))
        total = total + jnp.maximum(pos + MARGIN - neg, 0.0) \
                      + jnp.maximum(NEG_C2C_MARGIN - negc2c, 0.0)
    return total / B


if __name__ == "__main__":
    key = jax.random.PRNGKey(0)
    k_x, k_c = jax.random.split(key)

    B = 2
    # x is assumed L2-normalized per the module docstring (||x||_2 = 1).
    x_raw = jax.random.normal(k_x, (B, FEA_DIM), dtype=jnp.float32)
    x = x_raw / jnp.linalg.norm(x_raw, axis=1, keepdims=True)

    labels = jnp.array([3, 17], dtype=jnp.int32)

    # nn.Parameter(torch.randn(num_classes, fea_dim)) stand-in.  The class-axis
    # pad to 128 is done ONCE here at parameter setup (not per loss call).
    centers = jax.random.normal(k_c, (NUM_CLASSES, FEA_DIM), dtype=jnp.float32)
    centers_padded = jnp.zeros((CLASS_PAD, FEA_DIM), jnp.float32).at[:NUM_CLASSES].set(centers)

    loss = triplet_center_cosine_rf_loss(x, labels, centers_padded, NUM_CLASSES)
    loss = jax.block_until_ready(loss)

    ref = reference_loss(x, labels, centers)
    assert jnp.allclose(loss, ref, rtol=1e-5, atol=1e-4), (loss, ref)

    print("KERNEL_OK")
</pallas_src>

<mosaic_0001>
module attributes {stable_mosaic.version = 11 : i64} {
  func.func @center_prep_kernel(%arg0: memref<128x512xf32, #tpu.memory_space<vmem>>, %arg1: memref<128x512xf32, #tpu.memory_space<vmem>>, %arg2: memref<1x128xf32, #tpu.memory_space<vmem>>) attributes {dimension_semantics = [], scalar_prefetch = 0 : i64, scratch_operands = 0 : i64, tpu.core_type = #tpu.core_type<tc>} {
    %c0 = arith.constant 0 : index
    %c0_0 = arith.constant 0 : index
    %0 = vector.load %arg0[%c0, %c0_0] : memref<128x512xf32, #tpu.memory_space<vmem>>, vector<128x512xf32>
    %1 = arith.mulf %0, %0 : vector<128x512xf32>
    %cst = arith.constant dense<0.000000e+00> : vector<128xf32>
    %2 = vector.multi_reduction <add>, %1, %cst [1] : vector<128x512xf32> to vector<128xf32>
    %3 = vector.shape_cast %2 : vector<128xf32> to vector<128x1xf32>
    %cst_1 = arith.constant 1.000000e-24 : f32
    %4 = vector.broadcast %cst_1 : f32 to vector<128x1xf32>
    %5 = arith.maximumf %3, %4 : vector<128x1xf32>
    %6 = math.rsqrt %5 : vector<128x1xf32>
    %7 = vector.broadcast %6 : vector<128x1xf32> to vector<128x512xf32>
    %8 = arith.mulf %0, %7 : vector<128x512xf32>
    %c0_2 = arith.constant 0 : index
    %c0_3 = arith.constant 0 : index
    %9 = vector.load %arg1[%c0_2, %c0_3] : memref<128x512xf32, #tpu.memory_space<vmem>>, vector<128x512xf32>
    tpu.vector_store %arg1[%c0_2, %c0_3], %8 {strides = array<i32>} : memref<128x512xf32, #tpu.memory_space<vmem>>, vector<128x512xf32>,
    %cst_4 = arith.constant dense<0.000000e+00> : vector<128x128xf32>
    %10 = tpu.matmul %8, %0, %cst_4 {dimension_numbers = #tpu.dot_dimension_numbers<[1], [1], [0], [0], [0, 0, 1, 0], [], []>} : vector<128x512xf32>, vector<128x512xf32>, vector<128x128xf32> -> vector<128x128xf32>
    %11 = tpu.iota {dimensions = array<i32: 0>} : vector<128x128xi32>
    %12 = tpu.iota {dimensions = array<i32: 1>} : vector<128x128xi32>
    %13 = arith.cmpi ne, %11, %12 : vector<128x128xi32>
    %c21_i32 = arith.constant 21 : i32
    %14 = vector.broadcast %c21_i32 : i32 to vector<128x128xi32>
    %15 = arith.cmpi slt, %11, %14 : vector<128x128xi32>
    %16 = arith.andi %13, %15 : vector<128x128xi1>
    %cst_5 = arith.constant -1.000000e+30 : f32
    %17 = vector.broadcast %cst_5 : f32 to vector<128x128xf32>
    %18 = arith.select %16, %10, %17 : vector<128x128xi1>, vector<128x128xf32>
    %cst_6 = arith.constant dense<0xFF800000> : vector<128xf32>
    %19 = vector.multi_reduction <maximumf>, %18, %cst_6 [0] : vector<128x128xf32> to vector<128xf32>
    %20 = vector.shape_cast %19 : vector<128xf32> to vector<1x128xf32>
    %cst_7 = arith.constant 1.000000e+00 : f32
    %21 = vector.broadcast %cst_7 : f32 to vector<1x128xf32>
    %22 = arith.subf %21, %20 : vector<1x128xf32>
    %c0_8 = arith.constant 0 : index
    %c0_9 = arith.constant 0 : index
    %23 = vector.load %arg2[%c0_8, %c0_9] : memref<1x128xf32, #tpu.memory_space<vmem>>, vector<1x128xf32>
    tpu.vector_store %arg2[%c0_8, %c0_9], %22 {strides = array<i32>} : memref<1x128xf32, #tpu.memory_space<vmem>>, vector<1x128xf32>,
    return
  }
}

</mosaic_0001>

<llo_original>
// kernel: tpu_custom_call.1
$region0: #{tpu_custom_call.1}
  #allocation0 [shape = 'u32[]', space=smem, size = 0x4, offset = 0x4, fixed_abs, tag = 'smem constant byte address 0x4 - core index']
  #allocation1 [shape = 'u32[144,128]{1,0:T(1,128)}', space=vmem, size = 0x12000, scoped, tag = 'internal scratch']
  %s0 = inlined_call_operand.hbm [shape: f32[128,512], index: 0, kind: input, shape index: {}]
  %s1 = inlined_call_operand.hbm [shape: f32[128,512], index: 1, kind: output, shape index: {0}]
  %s2 = inlined_call_operand.hbm [shape: f32[1,128], index: 2, kind: output, shape index: {1}]
  %3 = xla_tuple %s1, %s2
  %s4 = sld [smem:[#allocation0]]
  $region26: #{tpu_custom_call.1} parent=0
    _
  %s6 = ssub.s32 1, %s4
  %s7 = scalar_select 0, %s6, %s4
  $region1: #{tpu_custom_call.1} parent=0
    #allocation2 [shape = 'u8[262144]{0}', space=vmem, size = 0x40000, scoped, tag = 'input window, operand 0, single buffered']
    #allocation3 [shape = 's32[1]{0}', space=sflag, size = 0x4, scoped, tag = 'scoped memory for tpu_custom_call.1']
    #allocation4 [shape = 's32[1]{0}', space=sflag, size = 0x4, scoped, tag = 'scoped memory for tpu_custom_call.1']
    #allocation5 [shape = 'u8[262144]{0}', space=vmem, size = 0x40000, scoped, tag = 'output window, operand 0, single buffered']
    #allocation6 [shape = 'u8[512]{0}', space=vmem, size = 0x400, scoped, tag = 'output window, operand 1, single buffered']
    #allocation7 [shape = 's32[1]{0}', space=sflag, size = 0x4, scoped, tag = 'scoped memory for tpu_custom_call.1']
    %8 = vsyncpa [#allocation3], 0
    %9 = vsyncpa [#allocation4], 0
    %10 = vsyncpa [#allocation7], 0
    // Predicated region
    $region2: #{tpu_custom_call.1} parent=1 // pred_check
      _
    $region3: #{tpu_custom_call.1} parent=1 // pred_check_branch
      %12 = sbr.rel (0) target = $region5
    $region4: #{tpu_custom_call.1} parent=1 // pred_region
      %s14 = ssub.s32 8192, 8192
      %15 = vsyncadd [#allocation3], %s14
      %s16 = sshll.u32 [#allocation2], 4
      %s17 = int_to_ptr.vmem [resolvable:$true] %s16
      %22 = dma.hbm_to_vmem [thread:$0]  %s0, 8192, %s17, [#allocation3], 512, 512, 32
    $region5: #{tpu_custom_call.1} parent=1 // pred_fallthru
      _
    // Predicated region
    $region6: #{tpu_custom_call.1} parent=1 // pred_check
      _
    $region7: #{tpu_custom_call.1} parent=1 // pred_check_branch
      %24 = sbr.rel (0) target = $region9
    $region8: #{tpu_custom_call.1} parent=1 // pred_region
      %25 = dma.done [#allocation3], 8192
    $region9: #{tpu_custom_call.1} parent=1 // pred_fallthru
      _
    %v26 = vld [vmem:[#allocation2] sm:$0xff]
    %v27 = vld [vmem:[#allocation2 + $0x8] sm:$0xff]
    %v28 = vld [vmem:[#allocation2 + $0x10] sm:$0xff]
    %v29 = vld [vmem:[#allocation2 + $0x18] sm:$0xff]
    %v30 = vld [vmem:[#allocation2 + $0x20] sm:$0xff]
    %v31 = vld [vmem:[#allocation2 + $0x28] sm:$0xff]
    %v32 = vld [vmem:[#allocation2 + $0x30] sm:$0xff]
    %v33 = vld [vmem:[#allocation2 + $0x38] sm:$0xff]
    %v34 = vld [vmem:[#allocation2 + $0x40] sm:$0xff]
    %v35 = vld [vmem:[#allocation2 + $0x48] sm:$0xff]
    %v36 = vld [vmem:[#allocation2 + $0x50] sm:$0xff]
    %v37 = vld [vmem:[#allocation2 + $0x58] sm:$0xff]
    %v38 = vld [vmem:[#allocation2 + $0x60] sm:$0xff]
    %v39 = vld [vmem:[#allocation2 + $0x68] sm:$0xff]
    %v40 = vld [vmem:[#allocation2 + $0x70] sm:$0xff]
    %v41 = vld [vmem:[#allocation2 + $0x78] sm:$0xff]
    %v42 = vld [vmem:[#allocation2 + $0x80] sm:$0xff]
    %v43 = vld [vmem:[#allocation2 + $0x88] sm:$0xff]
    %v44 = vld [vmem:[#allocation2 + $0x90] sm:$0xff]
    %v45 = vld [vmem:[#allocation2 + $0x98] sm:$0xff]
    %v46 = vld [vmem:[#allocation2 + $0xa0] sm:$0xff]
    %v47 = vld [vmem:[#allocation2 + $0xa8] sm:$0xff]
    %v48 = vld [vmem:[#allocation2 + $0xb0] sm:$0xff]
    %v49 = vld [vmem:[#allocation2 + $0xb8] sm:$0xff]
    %v50 = vld [vmem:[#allocation2 + $0xc0] sm:$0xff]
    %v51 = vld [vmem:[#allocation2 + $0xc8] sm:$0xff]
    %v52 = vld [vmem:[#allocation2 + $0xd0] sm:$0xff]
    %v53 = vld [vmem:[#allocation2 + $0xd8] sm:$0xff]
    %v54 = vld [vmem:[#allocation2 + $0xe0] sm:$0xff]
    %v55 = vld [vmem:[#allocation2 + $0xe8] sm:$0xff]
    %v56 = vld [vmem:[#allocation2 + $0xf0] sm:$0xff]
    %v57 = vld [vmem:[#allocation2 + $0xf8] sm:$0xff]
    %v58 = vld [vmem:[#allocation2 + $0x100] sm:$0xff]
    %v59 = vld [vmem:[#allocation2 + $0x108] sm:$0xff]
    %v60 = vld [vmem:[#allocation2 + $0x110] sm:$0xff]
    %v61 = vld [vmem:[#allocation2 + $0x118] sm:$0xff]
    %v62 = vld [vmem:[#allocation2 + $0x120] sm:$0xff]
    %v63 = vld [vmem:[#allocation2 + $0x128] sm:$0xff]
    %v64 = vld [vmem:[#allocation2 + $0x130] sm:$0xff]
    %v65 = vld [vmem:[#allocation2 + $0x138] sm:$0xff]
    %v66 = vld [vmem:[#allocation2 + $0x140] sm:$0xff]
    %v67 = vld [vmem:[#allocation2 + $0x148] sm:$0xff]
    %v68 = vld [vmem:[#allocation2 + $0x150] sm:$0xff]
    %v69 = vld [vmem:[#allocation2 + $0x158] sm:$0xff]
    %v70 = vld [vmem:[#allocation2 + $0x160] sm:$0xff]
    %v71 = vld [vmem:[#allocation2 + $0x168] sm:$0xff]
    %v72 = vld [vmem:[#allocation2 + $0x170] sm:$0xff]
    %v73 = vld [vmem:[#allocation2 + $0x178] sm:$0xff]
    %v74 = vld [vmem:[#allocation2 + $0x180] sm:$0xff]
    %v75 = vld [vmem:[#allocation2 + $0x188] sm:$0xff]
    %v76 = vld [vmem:[#allocation2 + $0x190] sm:$0xff]
    %v77 = vld [vmem:[#allocation2 + $0x198] sm:$0xff]
    %v78 = vld [vmem:[#allocation2 + $0x1a0] sm:$0xff]
    %v79 = vld [vmem:[#allocation2 + $0x1a8] sm:$0xff]
    %v80 = vld [vmem:[#allocation2 + $0x1b0] sm:$0xff]
    %v81 = vld [vmem:[#allocation2 + $0x1b8] sm:$0xff]
    %v82 = vld [vmem:[#allocation2 + $0x1c0] sm:$0xff]
    %v83 = vld [vmem:[#allocation2 + $0x1c8] sm:$0xff]
    %v84 = vld [vmem:[#allocation2 + $0x1d0] sm:$0xff]
    %v85 = vld [vmem:[#allocation2 + $0x1d8] sm:$0xff]
    %v86 = vld [vmem:[#allocation2 + $0x1e0] sm:$0xff]
    %v87 = vld [vmem:[#allocation2 + $0x1e8] sm:$0xff]
    %v88 = vld [vmem:[#allocation2 + $0x1f0] sm:$0xff]
    %v89 = vld [vmem:[#allocation2 + $0x1f8] sm:$0xff]
    %v90 = vmul.f32 %v26, %v26
    %v91 = vmul.f32 %v27, %v27
    %v92 = vmul.f32 %v28, %v28
    %v93 = vmul.f32 %v29, %v29
    %v94 = vmul.f32 %v30, %v30
    %v95 = vmul.f32 %v31, %v31
    %v96 = vmul.f32 %v32, %v32
    %v97 = vmul.f32 %v33, %v33
    %v98 = vmul.f32 %v34, %v34
    %v99 = vmul.f32 %v35, %v35
    %v100 = vmul.f32 %v36, %v36
    %v101 = vmul.f32 %v37, %v37
    %v102 = vmul.f32 %v38, %v38
    %v103 = vmul.f32 %v39, %v39
    %v104 = vmul.f32 %v40, %v40
    %v105 = vmul.f32 %v41, %v41
    %v106 = vmul.f32 %v42, %v42
    %v107 = vmul.f32 %v43, %v43
    %v108 = vmul.f32 %v44, %v44
    %v109 = vmul.f32 %v45, %v45
    %v110 = vmul.f32 %v46, %v46
    %v111 = vmul.f32 %v47, %v47
    %v112 = vmul.f32 %v48, %v48
    %v113 = vmul.f32 %v49, %v49
    %v114 = vmul.f32 %v50, %v50
    %v115 = vmul.f32 %v51, %v51
    %v116 = vmul.f32 %v52, %v52
    %v117 = vmul.f32 %v53, %v53
    %v118 = vmul.f32 %v54, %v54
    %v119 = vmul.f32 %v55, %v55
    %v120 = vmul.f32 %v56, %v56
    %v121 = vmul.f32 %v57, %v57
    %v122 = vmul.f32 %v58, %v58
    %v123 = vmul.f32 %v59, %v59
    %v124 = vmul.f32 %v60, %v60
    %v125 = vmul.f32 %v61, %v61
    %v126 = vmul.f32 %v62, %v62
    %v127 = vmul.f32 %v63, %v63
    %v128 = vmul.f32 %v64, %v64
    %v129 = vmul.f32 %v65, %v65
    %v130 = vmul.f32 %v66, %v66
    %v131 = vmul.f32 %v67, %v67
    %v132 = vmul.f32 %v68, %v68
    %v133 = vmul.f32 %v69, %v69
    %v134 = vmul.f32 %v70, %v70
    %v135 = vmul.f32 %v71, %v71
    %v136 = vmul.f32 %v72, %v72
    %v137 = vmul.f32 %v73, %v73
    %v138 = vmul.f32 %v74, %v74
    %v139 = vmul.f32 %v75, %v75
    %v140 = vmul.f32 %v76, %v76
    %v141 = vmul.f32 %v77, %v77
    %v142 = vmul.f32 %v78, %v78
    %v143 = vmul.f32 %v79, %v79
    %v144 = vmul.f32 %v80, %v80
    %v145 = vmul.f32 %v81, %v81
    %v146 = vmul.f32 %v82, %v82
    %v147 = vmul.f32 %v83, %v83
    %v148 = vmul.f32 %v84, %v84
    %v149 = vmul.f32 %v85, %v85
    %v150 = vmul.f32 %v86, %v86
    %v151 = vmul.f32 %v87, %v87
    %v152 = vmul.f32 %v88, %v88
    %v153 = vmul.f32 %v89, %v89
    %v154 = vadd.f32 %v90, %v91
    %v155 = vadd.f32 %v154, %v92
    %v156 = vadd.f32 %v155, %v93
    %157 = vadd.xlane.f32.xlu0 %v156
    %v158 = vpop.xlane.xlu0 %157
    %v159 = vadd.f32 %v94, %v95
    %v160 = vadd.f32 %v159, %v96
    %v161 = vadd.f32 %v160, %v97
    %162 = vadd.xlane.f32.xlu0 %v161
    %v163 = vpop.xlane.xlu0 %162
    %v164 = vadd.f32 %v98, %v99
    %v165 = vadd.f32 %v164, %v100
    %v166 = vadd.f32 %v165, %v101
    %167 = vadd.xlane.f32.xlu0 %v166
    %v168 = vpop.xlane.xlu0 %167
    %v169 = vadd.f32 %v102, %v103
    %v170 = vadd.f32 %v169, %v104
    %v171 = vadd.f32 %v170, %v105
    %172 = vadd.xlane.f32.xlu0 %v171
    %v173 = vpop.xlane.xlu0 %172
    %v174 = vadd.f32 %v106, %v107
    %v175 = vadd.f32 %v174, %v108
    %v176 = vadd.f32 %v175, %v109
    %177 = vadd.xlane.f32.xlu0 %v176
    %v178 = vpop.xlane.xlu0 %177
    %v179 = vadd.f32 %v110, %v111
    %v180 = vadd.f32 %v179, %v112
    %v181 = vadd.f32 %v180, %v113
    %182 = vadd.xlane.f32.xlu0 %v181
    %v183 = vpop.xlane.xlu0 %182
    %v184 = vadd.f32 %v114, %v115
    %v185 = vadd.f32 %v184, %v116
    %v186 = vadd.f32 %v185, %v117
    %187 = vadd.xlane.f32.xlu0 %v186
    %v188 = vpop.xlane.xlu0 %187
    %v189 = vadd.f32 %v118, %v119
    %v190 = vadd.f32 %v189, %v120
    %v191 = vadd.f32 %v190, %v121
    %192 = vadd.xlane.f32.xlu0 %v191
    %v193 = vpop.xlane.xlu0 %192
    %v194 = vadd.f32 %v122, %v123
    %v195 = vadd.f32 %v194, %v124
    %v196 = vadd.f32 %v195, %v125
    %197 = vadd.xlane.f32.xlu0 %v196
    %v198 = vpop.xlane.xlu0 %197
    %v199 = vadd.f32 %v126, %v127
    %v200 = vadd.f32 %v199, %v128
    %v201 = vadd.f32 %v200, %v129
    %202 = vadd.xlane.f32.xlu0 %v201
    %v203 = vpop.xlane.xlu0 %202
    %v204 = vadd.f32 %v130, %v131
    %v205 = vadd.f32 %v204, %v132
    %v206 = vadd.f32 %v205, %v133
    %207 = vadd.xlane.f32.xlu0 %v206
    %v208 = vpop.xlane.xlu0 %207
    %v209 = vadd.f32 %v134, %v135
    %v210 = vadd.f32 %v209, %v136
    %v211 = vadd.f32 %v210, %v137
    %212 = vadd.xlane.f32.xlu0 %v211
    %v213 = vpop.xlane.xlu0 %212
    %v214 = vadd.f32 %v138, %v139
    %v215 = vadd.f32 %v214, %v140
    %v216 = vadd.f32 %v215, %v141
    %217 = vadd.xlane.f32.xlu0 %v216
    %v218 = vpop.xlane.xlu0 %217
    %v219 = vadd.f32 %v142, %v143
    %v220 = vadd.f32 %v219, %v144
    %v221 = vadd.f32 %v220, %v145
    %222 = vadd.xlane.f32.xlu0 %v221
    %v223 = vpop.xlane.xlu0 %222
    %v224 = vadd.f32 %v146, %v147
    %v225 = vadd.f32 %v224, %v148
    %v226 = vadd.f32 %v225, %v149
    %227 = vadd.xlane.f32.xlu0 %v226
    %v228 = vpop.xlane.xlu0 %227
    %v229 = vadd.f32 %v150, %v151
    %v230 = vadd.f32 %v229, %v152
    %v231 = vadd.f32 %v230, %v153
    %232 = vadd.xlane.f32.xlu0 %v231
    %v233 = vpop.xlane.xlu0 %232
    %v234 = vmax.f32 %v158, 1e-24
    %v235 = vmax.f32 %v163, 1e-24
    %v236 = vmax.f32 %v168, 1e-24
    %v237 = vmax.f32 %v173, 1e-24
    %v238 = vmax.f32 %v178, 1e-24
    %v239 = vmax.f32 %v183, 1e-24
    %v240 = vmax.f32 %v188, 1e-24
    %v241 = vmax.f32 %v193, 1e-24
    %v242 = vmax.f32 %v198, 1e-24
    %v243 = vmax.f32 %v203, 1e-24
    %v244 = vmax.f32 %v208, 1e-24
    %v245 = vmax.f32 %v213, 1e-24
    %v246 = vmax.f32 %v218, 1e-24
    %v247 = vmax.f32 %v223, 1e-24
    %v248 = vmax.f32 %v228, 1e-24
    %v249 = vmax.f32 %v233, 1e-24
    %v250 = vrsqrt.pop %v234
    %v251 = vrsqrt.pop %v235
    %v252 = vrsqrt.pop %v236
    %v253 = vrsqrt.pop %v237
    %v254 = vrsqrt.pop %v238
    %v255 = vrsqrt.pop %v239
    %v256 = vrsqrt.pop %v240
    %v257 = vrsqrt.pop %v241
    %v258 = vrsqrt.pop %v242
    %v259 = vrsqrt.pop %v243
    %v260 = vrsqrt.pop %v244
    %v261 = vrsqrt.pop %v245
    %v262 = vrsqrt.pop %v246
    %v263 = vrsqrt.pop %v247
    %v264 = vrsqrt.pop %v248
    %v265 = vrsqrt.pop %v249
    %v266 = vmul.f32 %v26, %v250
    %v267 = vmul.f32 %v27, %v250
    %v268 = vmul.f32 %v28, %v250
    %v269 = vmul.f32 %v29, %v250
    %v270 = vmul.f32 %v30, %v251
    %v271 = vmul.f32 %v31, %v251
    %v272 = vmul.f32 %v32, %v251
    %v273 = vmul.f32 %v33, %v251
    %v274 = vmul.f32 %v34, %v252
    %v275 = vmul.f32 %v35, %v252
    %v276 = vmul.f32 %v36, %v252
    %v277 = vmul.f32 %v37, %v252
    %v278 = vmul.f32 %v38, %v253
    %v279 = vmul.f32 %v39, %v253
    %v280 = vmul.f32 %v40, %v253
    %v281 = vmul.f32 %v41, %v253
    %v282 = vmul.f32 %v42, %v254
    %v283 = vmul.f32 %v43, %v254
    %v284 = vmul.f32 %v44, %v254
    %v285 = vmul.f32 %v45, %v254
    %v286 = vmul.f32 %v46, %v255
    %v287 = vmul.f32 %v47, %v255
    %v288 = vmul.f32 %v48, %v255
    %v289 = vmul.f32 %v49, %v255
    %v290 = vmul.f32 %v50, %v256
    %v291 = vmul.f32 %v51, %v256
    %v292 = vmul.f32 %v52, %v256
    %v293 = vmul.f32 %v53, %v256
    %v294 = vmul.f32 %v54, %v257
    %v295 = vmul.f32 %v55, %v257
    %v296 = vmul.f32 %v56, %v257
    %v297 = vmul.f32 %v57, %v257
    %v298 = vmul.f32 %v58, %v258
    %v299 = vmul.f32 %v59, %v258
    %v300 = vmul.f32 %v60, %v258
    %v301 = vmul.f32 %v61, %v258
    %v302 = vmul.f32 %v62, %v259
    %v303 = vmul.f32 %v63, %v259
    %v304 = vmul.f32 %v64, %v259
    %v305 = vmul.f32 %v65, %v259
    %v306 = vmul.f32 %v66, %v260
    %v307 = vmul.f32 %v67, %v260
    %v308 = vmul.f32 %v68, %v260
    %v309 = vmul.f32 %v69, %v260
    %v310 = vmul.f32 %v70, %v261
    %v311 = vmul.f32 %v71, %v261
    %v312 = vmul.f32 %v72, %v261
    %v313 = vmul.f32 %v73, %v261
    %v314 = vmul.f32 %v74, %v262
    %v315 = vmul.f32 %v75, %v262
    %v316 = vmul.f32 %v76, %v262
    %v317 = vmul.f32 %v77, %v262
    %v318 = vmul.f32 %v78, %v263
    %v319 = vmul.f32 %v79, %v263
    %v320 = vmul.f32 %v80, %v263
    %v321 = vmul.f32 %v81, %v263
    %v322 = vmul.f32 %v82, %v264
    %v323 = vmul.f32 %v83, %v264
    %v324 = vmul.f32 %v84, %v264
    %v325 = vmul.f32 %v85, %v264
    %v326 = vmul.f32 %v86, %v265
    %v327 = vmul.f32 %v87, %v265
    %v328 = vmul.f32 %v88, %v265
    %v329 = vmul.f32 %v89, %v265
    %330 = vst [vmem:[#allocation5] sm:$0xff] %v266
    %331 = vst [vmem:[#allocation5 + $0x8] sm:$0xff] %v267
    %332 = vst [vmem:[#allocation5 + $0x10] sm:$0xff] %v268
    %333 = vst [vmem:[#allocation5 + $0x18] sm:$0xff] %v269
    %334 = vst [vmem:[#allocation5 + $0x20] sm:$0xff] %v270
    %335 = vst [vmem:[#allocation5 + $0x28] sm:$0xff] %v271
    %336 = vst [vmem:[#allocation5 + $0x30] sm:$0xff] %v272
    %337 = vst [vmem:[#allocation5 + $0x38] sm:$0xff] %v273
    %338 = vst [vmem:[#allocation5 + $0x40] sm:$0xff] %v274
    %339 = vst [vmem:[#allocation5 + $0x48] sm:$0xff] %v275
    %340 = vst [vmem:[#allocation5 + $0x50] sm:$0xff] %v276
    %341 = vst [vmem:[#allocation5 + $0x58] sm:$0xff] %v277
    %342 = vst [vmem:[#allocation5 + $0x60] sm:$0xff] %v278
    %343 = vst [vmem:[#allocation5 + $0x68] sm:$0xff] %v279
    %344 = vst [vmem:[#allocation5 + $0x70] sm:$0xff] %v280
    %345 = vst [vmem:[#allocation5 + $0x78] sm:$0xff] %v281
    %346 = vst [vmem:[#allocation5 + $0x80] sm:$0xff] %v282
    %347 = vst [vmem:[#allocation5 + $0x88] sm:$0xff] %v283
    %348 = vst [vmem:[#allocation5 + $0x90] sm:$0xff] %v284
    %349 = vst [vmem:[#allocation5 + $0x98] sm:$0xff] %v285
    %350 = vst [vmem:[#allocation5 + $0xa0] sm:$0xff] %v286
    %351 = vst [vmem:[#allocation5 + $0xa8] sm:$0xff] %v287
    %352 = vst [vmem:[#allocation5 + $0xb0] sm:$0xff] %v288
    %353 = vst [vmem:[#allocation5 + $0xb8] sm:$0xff] %v289
    %354 = vst [vmem:[#allocation5 + $0xc0] sm:$0xff] %v290
    %355 = vst [vmem:[#allocation5 + $0xc8] sm:$0xff] %v291
    %356 = vst [vmem:[#allocation5 + $0xd0] sm:$0xff] %v292
    %357 = vst [vmem:[#allocation5 + $0xd8] sm:$0xff] %v293
    %358 = vst [vmem:[#allocation5 + $0xe0] sm:$0xff] %v294
    %359 = vst [vmem:[#allocation5 + $0xe8] sm:$0xff] %v295
    %360 = vst [vmem:[#allocation5 + $0xf0] sm:$0xff] %v296
    %361 = vst [vmem:[#allocation5 + $0xf8] sm:$0xff] %v297
    %362 = vst [vmem:[#allocation5 + $0x100] sm:$0xff] %v298
    %363 = vst [vmem:[#allocation5 + $0x108] sm:$0xff] %v299
    %364 = vst [vmem:[#allocation5 + $0x110] sm:$0xff] %v300
    %365 = vst [vmem:[#allocation5 + $0x118] sm:$0xff] %v301
    %366 = vst [vmem:[#allocation5 + $0x120] sm:$0xff] %v302
    %367 = vst [vmem:[#allocation5 + $0x128] sm:$0xff] %v303
    %368 = vst [vmem:[#allocation5 + $0x130] sm:$0xff] %v304
    %369 = vst [vmem:[#allocation5 + $0x138] sm:$0xff] %v305
    %370 = vst [vmem:[#allocation5 + $0x140] sm:$0xff] %v306
    %371 = vst [vmem:[#allocation5 + $0x148] sm:$0xff] %v307
    %372 = vst [vmem:[#allocation5 + $0x150] sm:$0xff] %v308
    %373 = vst [vmem:[#allocation5 + $0x158] sm:$0xff] %v309
    %374 = vst [vmem:[#allocation5 + $0x160] sm:$0xff] %v310
    %375 = vst [vmem:[#allocation5 + $0x168] sm:$0xff] %v311
    %376 = vst [vmem:[#allocation5 + $0x170] sm:$0xff] %v312
    %377 = vst [vmem:[#allocation5 + $0x178] sm:$0xff] %v313
    %378 = vst [vmem:[#allocation5 + $0x180] sm:$0xff] %v314
    %379 = vst [vmem:[#allocation5 + $0x188] sm:$0xff] %v315
    %380 = vst [vmem:[#allocation5 + $0x190] sm:$0xff] %v316
    %381 = vst [vmem:[#allocation5 + $0x198] sm:$0xff] %v317
    %382 = vst [vmem:[#allocation5 + $0x1a0] sm:$0xff] %v318
    %383 = vst [vmem:[#allocation5 + $0x1a8] sm:$0xff] %v319
    %384 = vst [vmem:[#allocation5 + $0x1b0] sm:$0xff] %v320
    %385 = vst [vmem:[#allocation5 + $0x1b8] sm:$0xff] %v321
    %386 = vst [vmem:[#allocation5 + $0x1c0] sm:$0xff] %v322
    %387 = vst [vmem:[#allocation5 + $0x1c8] sm:$0xff] %v323
    %388 = vst [vmem:[#allocation5 + $0x1d0] sm:$0xff] %v324
    %389 = vst [vmem:[#allocation5 + $0x1d8] sm:$0xff] %v325
    %390 = vst [vmem:[#allocation5 + $0x1e0] sm:$0xff] %v326
    %391 = vst [vmem:[#allocation5 + $0x1e8] sm:$0xff] %v327
    %392 = vst [vmem:[#allocation5 + $0x1f0] sm:$0xff] %v328
    %393 = vst [vmem:[#allocation5 + $0x1f8] sm:$0xff] %v329
    %394 = vmatprep.subr.mxu0 %v87
    %395 = vmatpush1.xpose.msra.mxu0 %v86
    %396 = vmatprep.subr.mxu0 %v83
    %397 = vmatpush1.xpose.msra.mxu0 %v82
    %398 = vmatprep.subr.mxu0 %v79
    %399 = vmatpush1.xpose.msra.mxu0 %v78
    %400 = vmatprep.subr.mxu0 %v75
    %401 = vmatpush1.xpose.msra.mxu0 %v74
    %402 = vmatprep.subr.mxu0 %v71
    %403 = vmatpush1.xpose.msra.mxu0 %v70
    %404 = vmatprep.subr.mxu0 %v67
    %405 = vmatpush1.xpose.msra.mxu0 %v66
    %406 = vmatprep.subr.mxu0 %v63
    %407 = vmatpush1.xpose.msra.mxu0 %v62
    %408 = vmatprep.subr.mxu0 %v59
    %409 = vmatpush1.xpose.msra.mxu0 %v58
    %410 = vmatprep.subr.mxu0 %v55
    %411 = vmatpush1.xpose.msra.mxu0 %v54
    %412 = vmatprep.subr.mxu0 %v51
    %413 = vmatpush1.xpose.msra.mxu0 %v50
    %414 = vmatprep.subr.mxu0 %v47
    %415 = vmatpush1.xpose.msra.mxu0 %v46
    %416 = vmatprep.subr.mxu0 %v43
    %417 = vmatpush1.xpose.msra.mxu0 %v42
    %418 = vmatprep.subr.mxu0 %v39
    %419 = vmatpush1.xpose.msra.mxu0 %v38
    %420 = vmatprep.subr.mxu0 %v35
    %421 = vmatpush1.xpose.msra.mxu0 %v34
    %422 = vmatprep.subr.mxu0 %v31
    %423 = vmatpush1.xpose.msra.mxu0 %v30
    %424 = vmatprep.subr.mxu0 %v27
    %425 = vmatpush1.xpose.msra.mxu0 %v26
    %426 = vmatprep.subr.mxu0 0.0
    %427 = vmatpush2.xpose.msra.mxu0 0.0
    %428 = vmatprep.subr.mxu0 0.0
    %429 = vmatpush2.xpose.msra.mxu0 0.0
    %430 = vmatprep.subr.mxu0 0.0
    %431 = vmatpush2.xpose.msra.mxu0 0.0
    %432 = vmatprep.subr.mxu0 0.0
    %433 = vmatpush2.xpose.msra.mxu0 0.0
    %434 = vmatprep.subr.mxu0 0.0
    %435 = vmatpush2.xpose.msra.mxu0 0.0
    %436 = vmatprep.subr.mxu0 0.0
    %437 = vmatpush2.xpose.msra.mxu0 0.0
    %438 = vmatprep.subr.mxu0 0.0
    %439 = vmatpush2.xpose.msra.mxu0 0.0
    %440 = vmatprep.subr.mxu0 0.0
    %441 = vmatpush2.xpose.msra.mxu0 0.0
    %442 = vmatprep.subr.mxu0 0.0
    %443 = vmatpush2.xpose.msra.mxu0 0.0
    %444 = vmatprep.subr.mxu0 0.0
    %445 = vmatpush2.xpose.msra.mxu0 0.0
    %446 = vmatprep.subr.mxu0 0.0
    %447 = vmatpush2.xpose.msra.mxu0 0.0
    %448 = vmatprep.subr.mxu0 0.0
    %449 = vmatpush2.xpose.msra.mxu0 0.0
    %450 = vmatprep.subr.mxu0 0.0
    %451 = vmatpush2.xpose.msra.mxu0 0.0
    %452 = vmatprep.subr.mxu0 0.0
    %453 = vmatpush2.xpose.msra.mxu0 0.0
    %454 = vmatprep.subr.mxu0 0.0
    %455 = vmatpush2.xpose.msra.mxu0 0.0
    %456 = vmatprep.subr.mxu0 0.0
    %457 = vmatpush2.xpose.msra.mxu0 0.0
    %458 = vmatprep.mubr.f32.mxu0 %v267
    %459 = vmatmul.mubr.f32.gmra.mxu0 %v266
    %v460 = vpop.f32.mrf.mxu0
    %v461 = vadd.f32 0.0, %v460
    %v462 = vpop.f32.mrf.mxu0
    %463 = vmatprep.mubr.f32.mxu0 %v271
    %464 = vmatmul.mubr.f32.gmra.mxu0 %v270
    %v465 = vpop.f32.mrf.mxu0
    %v466 = vadd.f32 0.0, %v465
    %v467 = vpop.f32.mrf.mxu0
    %468 = vmatprep.mubr.f32.mxu0 %v275
    %469 = vmatmul.mubr.f32.gmra.mxu0 %v274
    %v470 = vpop.f32.mrf.mxu0
    %v471 = vadd.f32 0.0, %v470
    %v472 = vpop.f32.mrf.mxu0
    %473 = vmatprep.mubr.f32.mxu0 %v279
    %474 = vmatmul.mubr.f32.gmra.mxu0 %v278
    %v475 = vpop.f32.mrf.mxu0
    %v476 = vadd.f32 0.0, %v475
    %v477 = vpop.f32.mrf.mxu0
    %478 = vmatprep.mubr.f32.mxu0 %v283
    %479 = vmatmul.mubr.f32.gmra.mxu0 %v282
    %v480 = vpop.f32.mrf.mxu0
    %v481 = vadd.f32 0.0, %v480
    %v482 = vpop.f32.mrf.mxu0
    %483 = vmatprep.mubr.f32.mxu0 %v287
    %484 = vmatmul.mubr.f32.gmra.mxu0 %v286
    %v485 = vpop.f32.mrf.mxu0
    %v486 = vadd.f32 0.0, %v485
    %v487 = vpop.f32.mrf.mxu0
    %488 = vmatprep.mubr.f32.mxu0 %v291
    %489 = vmatmul.mubr.f32.gmra.mxu0 %v290
    %v490 = vpop.f32.mrf.mxu0
    %v491 = vadd.f32 0.0, %v490
    %v492 = vpop.f32.mrf.mxu0
    %493 = vmatprep.mubr.f32.mxu0 %v295
    %494 = vmatmul.mubr.f32.gmra.mxu0 %v294
    %v495 = vpop.f32.mrf.mxu0
    %v496 = vadd.f32 0.0, %v495
    %v497 = vpop.f32.mrf.mxu0
    %498 = vmatprep.mubr.f32.mxu0 %v299
    %499 = vmatmul.mubr.f32.gmra.mxu0 %v298
    %v500 = vpop.f32.mrf.mxu0
    %v501 = vadd.f32 0.0, %v500
    %v502 = vpop.f32.mrf.mxu0
    %503 = vmatprep.mubr.f32.mxu0 %v303
    %504 = vmatmul.mubr.f32.gmra.mxu0 %v302
    %v505 = vpop.f32.mrf.mxu0
    %v506 = vadd.f32 0.0, %v505
    %v507 = vpop.f32.mrf.mxu0
    %508 = vmatprep.mubr.f32.mxu0 %v307
    %509 = vmatmul.mubr.f32.gmra.mxu0 %v306
    %v510 = vpop.f32.mrf.mxu0
    %v511 = vadd.f32 0.0, %v510
    %v512 = vpop.f32.mrf.mxu0
    %513 = vmatprep.mubr.f32.mxu0 %v311
    %514 = vmatmul.mubr.f32.gmra.mxu0 %v310
    %v515 = vpop.f32.mrf.mxu0
    %v516 = vadd.f32 0.0, %v515
    %v517 = vpop.f32.mrf.mxu0
    %518 = vmatprep.mubr.f32.mxu0 %v315
    %519 = vmatmul.mubr.f32.gmra.mxu0 %v314
    %v520 = vpop.f32.mrf.mxu0
    %v521 = vadd.f32 0.0, %v520
    %v522 = vpop.f32.mrf.mxu0
    %523 = vmatprep.mubr.f32.mxu0 %v319
    %524 = vmatmul.mubr.f32.gmra.mxu0 %v318
    %v525 = vpop.f32.mrf.mxu0
    %v526 = vadd.f32 0.0, %v525
    %v527 = vpop.f32.mrf.mxu0
    %528 = vmatprep.mubr.f32.mxu0 %v323
    %529 = vmatmul.mubr.f32.gmra.mxu0 %v322
    %v530 = vpop.f32.mrf.mxu0
    %v531 = vadd.f32 0.0, %v530
    %v532 = vpop.f32.mrf.mxu0
    %533 = vmatprep.mubr.f32.mxu0 %v327
    %534 = vmatmul.mubr.f32.gmra.mxu0 %v326
    %v535 = vpop.f32.mrf.mxu0
    %v536 = vadd.f32 0.0, %v535
    %v537 = vpop.f32.mrf.mxu0
    %538 = vdwg.mxu0
    %539 = vmatprep.subr.mxu0 %v89
    %540 = vmatpush1.xpose.msra.mxu0 %v88
    %541 = vmatprep.subr.mxu0 %v85
    %542 = vmatpush1.xpose.msra.mxu0 %v84
    %543 = vmatprep.subr.mxu0 %v81
    %544 = vmatpush1.xpose.msra.mxu0 %v80
    %545 = vmatprep.subr.mxu0 %v77
    %546 = vmatpush1.xpose.msra.mxu0 %v76
    %547 = vmatprep.subr.mxu0 %v73
    %548 = vmatpush1.xpose.msra.mxu0 %v72
    %549 = vmatprep.subr.mxu0 %v69
    %550 = vmatpush1.xpose.msra.mxu0 %v68
    %551 = vmatprep.subr.mxu0 %v65
    %552 = vmatpush1.xpose.msra.mxu0 %v64
    %553 = vmatprep.subr.mxu0 %v61
    %554 = vmatpush1.xpose.msra.mxu0 %v60
    %555 = vmatprep.subr.mxu0 %v57
    %556 = vmatpush1.xpose.msra.mxu0 %v56
    %557 = vmatprep.subr.mxu0 %v53
    %558 = vmatpush1.xpose.msra.mxu0 %v52
    %559 = vmatprep.subr.mxu0 %v49
    %560 = vmatpush1.xpose.msra.mxu0 %v48
    %561 = vmatprep.subr.mxu0 %v45
    %562 = vmatpush1.xpose.msra.mxu0 %v44
    %563 = vmatprep.subr.mxu0 %v41
    %564 = vmatpush1.xpose.msra.mxu0 %v40
    %565 = vmatprep.subr.mxu0 %v37
    %566 = vmatpush1.xpose.msra.mxu0 %v36
    %567 = vmatprep.subr.mxu0 %v33
    %568 = vmatpush1.xpose.msra.mxu0 %v32
    %569 = vmatprep.subr.mxu0 %v29
    %570 = vmatpush1.xpose.msra.mxu0 %v28
    %571 = vmatprep.subr.mxu0 0.0
    %572 = vmatpush2.xpose.msra.mxu0 0.0
    %573 = vmatprep.subr.mxu0 0.0
    %574 = vmatpush2.xpose.msra.mxu0 0.0
    %575 = vmatprep.subr.mxu0 0.0
    %576 = vmatpush2.xpose.msra.mxu0 0.0
    %577 = vmatprep.subr.mxu0 0.0
    %578 = vmatpush2.xpose.msra.mxu0 0.0
    %579 = vmatprep.subr.mxu0 0.0
    %580 = vmatpush2.xpose.msra.mxu0 0.0
    %581 = vmatprep.subr.mxu0 0.0
    %582 = vmatpush2.xpose.msra.mxu0 0.0
    %583 = vmatprep.subr.mxu0 0.0
    %584 = vmatpush2.xpose.msra.mxu0 0.0
    %585 = vmatprep.subr.mxu0 0.0
    %586 = vmatpush2.xpose.msra.mxu0 0.0
    %587 = vmatprep.subr.mxu0 0.0
    %588 = vmatpush2.xpose.msra.mxu0 0.0
    %589 = vmatprep.subr.mxu0 0.0
    %590 = vmatpush2.xpose.msra.mxu0 0.0
    %591 = vmatprep.subr.mxu0 0.0
    %592 = vmatpush2.xpose.msra.mxu0 0.0
    %593 = vmatprep.subr.mxu0 0.0
    %594 = vmatpush2.xpose.msra.mxu0 0.0
    %595 = vmatprep.subr.mxu0 0.0
    %596 = vmatpush2.xpose.msra.mxu0 0.0
    %597 = vmatprep.subr.mxu0 0.0
    %598 = vmatpush2.xpose.msra.mxu0 0.0
    %599 = vmatprep.subr.mxu0 0.0
    %600 = vmatpush2.xpose.msra.mxu0 0.0
    %601 = vmatprep.subr.mxu0 0.0
    %602 = vmatpush2.xpose.msra.mxu0 0.0
    %603 = vmatprep.mubr.f32.mxu0 %v269
    %604 = vmatmul.mubr.f32.gmra.mxu0 %v268
    %v605 = vpop.f32.mrf.mxu0
    %v606 = vadd.f32 %v461, %v605
    %v607 = vpop.f32.mrf.mxu0
    %608 = vmatprep.mubr.f32.mxu0 %v273
    %609 = vmatmul.mubr.f32.gmra.mxu0 %v272
    %v610 = vpop.f32.mrf.mxu0
    %v611 = vadd.f32 %v466, %v610
    %v612 = vpop.f32.mrf.mxu0
    %613 = vmatprep.mubr.f32.mxu0 %v277
    %614 = vmatmul.mubr.f32.gmra.mxu0 %v276
    %v615 = vpop.f32.mrf.mxu0
    %v616 = vadd.f32 %v471, %v615
    %v617 = vpop.f32.mrf.mxu0
    %618 = vmatprep.mubr.f32.mxu0 %v281
    %619 = vmatmul.mubr.f32.gmra.mxu0 %v280
    %v620 = vpop.f32.mrf.mxu0
    %v621 = vadd.f32 %v476, %v620
    %v622 = vpop.f32.mrf.mxu0
    %623 = vmatprep.mubr.f32.mxu0 %v285
    %624 = vmatmul.mubr.f32.gmra.mxu0 %v284
    %v625 = vpop.f32.mrf.mxu0
    %v626 = vadd.f32 %v481, %v625
    %v627 = vpop.f32.mrf.mxu0
    %628 = vmatprep.mubr.f32.mxu0 %v289
    %629 = vmatmul.mubr.f32.gmra.mxu0 %v288
    %v630 = vpop.f32.mrf.mxu0
    %v631 = vadd.f32 %v486, %v630
    %v632 = vpop.f32.mrf.mxu0
    %633 = vmatprep.mubr.f32.mxu0 %v293
    %634 = vmatmul.mubr.f32.gmra.mxu0 %v292
    %v635 = vpop.f32.mrf.mxu0
    %v636 = vadd.f32 %v491, %v635
    %v637 = vpop.f32.mrf.mxu0
    %638 = vmatprep.mubr.f32.mxu0 %v297
    %639 = vmatmul.mubr.f32.gmra.mxu0 %v296
    %v640 = vpop.f32.mrf.mxu0
    %v641 = vadd.f32 %v496, %v640
    %v642 = vpop.f32.mrf.mxu0
    %643 = vmatprep.mubr.f32.mxu0 %v301
    %644 = vmatmul.mubr.f32.gmra.mxu0 %v300
    %v645 = vpop.f32.mrf.mxu0
    %v646 = vadd.f32 %v501, %v645
    %v647 = vpop.f32.mrf.mxu0
    %648 = vmatprep.mubr.f32.mxu0 %v305
    %649 = vmatmul.mubr.f32.gmra.mxu0 %v304
    %v650 = vpop.f32.mrf.mxu0
    %v651 = vadd.f32 %v506, %v650
    %v652 = vpop.f32.mrf.mxu0
    %653 = vmatprep.mubr.f32.mxu0 %v309
    %654 = vmatmul.mubr.f32.gmra.mxu0 %v308
    %v655 = vpop.f32.mrf.mxu0
    %v656 = vadd.f32 %v511, %v655
    %v657 = vpop.f32.mrf.mxu0
    %658 = vmatprep.mubr.f32.mxu0 %v313
    %659 = vmatmul.mubr.f32.gmra.mxu0 %v312
    %v660 = vpop.f32.mrf.mxu0
    %v661 = vadd.f32 %v516, %v660
    %v662 = vpop.f32.mrf.mxu0
    %663 = vmatprep.mubr.f32.mxu0 %v317
    %664 = vmatmul.mubr.f32.gmra.mxu0 %v316
    %v665 = vpop.f32.mrf.mxu0
    %v666 = vadd.f32 %v521, %v665
    %v667 = vpop.f32.mrf.mxu0
    %668 = vmatprep.mubr.f32.mxu0 %v321
    %669 = vmatmul.mubr.f32.gmra.mxu0 %v320
    %v670 = vpop.f32.mrf.mxu0
    %v671 = vadd.f32 %v526, %v670
    %v672 = vpop.f32.mrf.mxu0
    %673 = vmatprep.mubr.f32.mxu0 %v325
    %674 = vmatmul.mubr.f32.gmra.mxu0 %v324
    %v675 = vpop.f32.mrf.mxu0
    %v676 = vadd.f32 %v531, %v675
    %v677 = vpop.f32.mrf.mxu0
    %678 = vmatprep.mubr.f32.mxu0 %v329
    %679 = vmatmul.mubr.f32.gmra.mxu0 %v328
    %v680 = vpop.f32.mrf.mxu0
    %v681 = vadd.f32 %v536, %v680
    %v682 = vpop.f32.mrf.mxu0
    %683 = vdwg.mxu0
    %v684 = vlaneseq
    %v685 = vshrl.u32 %v684, 7
    %v686 = vadd.s32 %v685, 8
    %v687 = vadd.s32 %v685, 16
    %v688 = vadd.s32 %v685, 24
    %v689 = vadd.s32 %v685, 32
    %v690 = vadd.s32 %v685, 40
    %v691 = vadd.s32 %v685, 48
    %v692 = vadd.s32 %v685, 56
    %v693 = vadd.s32 %v685, 64
    %v694 = vadd.s32 %v685, 72
    %v695 = vadd.s32 %v685, 80
    %v696 = vadd.s32 %v685, 88
    %v697 = vadd.s32 %v685, 96
    %v698 = vadd.s32 %v685, 104
    %v699 = vadd.s32 %v685, 112
    %v700 = vadd.s32 %v685, 120
    %v701 = vlaneseq
    %v702 = vand.u32 %v701, 127
    %vm703 = vcmp.ne.s32.totalorder %v685, %v702
    %vm704 = vcmp.ne.s32.totalorder %v686, %v702
    %vm705 = vcmp.ne.s32.totalorder %v687, %v702
    %vm706 = vcmp.ne.s32.totalorder %v688, %v702
    %vm707 = vcmp.ne.s32.totalorder %v689, %v702
    %vm708 = vcmp.ne.s32.totalorder %v690, %v702
    %vm709 = vcmp.ne.s32.totalorder %v691, %v702
    %vm710 = vcmp.ne.s32.totalorder %v692, %v702
    %vm711 = vcmp.ne.s32.totalorder %v693, %v702
    %vm712 = vcmp.ne.s32.totalorder %v694, %v702
    %vm713 = vcmp.ne.s32.totalorder %v695, %v702
    %vm714 = vcmp.ne.s32.totalorder %v696, %v702
    %vm715 = vcmp.ne.s32.totalorder %v697, %v702
    %vm716 = vcmp.ne.s32.totalorder %v698, %v702
    %vm717 = vcmp.ne.s32.totalorder %v699, %v702
    %vm718 = vcmp.ne.s32.totalorder %v700, %v702
    %vm719 = vcmp.lt.s32.totalorder %v685, 21
    %vm720 = vcmp.lt.s32.totalorder %v686, 21
    %vm721 = vcmp.lt.s32.totalorder %v687, 21
    %vm722 = vcmp.lt.s32.totalorder %v688, 21
    %vm723 = vcmp.lt.s32.totalorder %v689, 21
    %vm724 = vcmp.lt.s32.totalorder %v690, 21
    %vm725 = vcmp.lt.s32.totalorder %v691, 21
    %vm726 = vcmp.lt.s32.totalorder %v692, 21
    %vm727 = vcmp.lt.s32.totalorder %v693, 21
    %vm728 = vcmp.lt.s32.totalorder %v694, 21
    %vm729 = vcmp.lt.s32.totalorder %v695, 21
    %vm730 = vcmp.lt.s32.totalorder %v696, 21
    %vm731 = vcmp.lt.s32.totalorder %v697, 21
    %vm732 = vcmp.lt.s32.totalorder %v698, 21
    %vm733 = vcmp.lt.s32.totalorder %v699, 21
    %vm734 = vcmp.lt.s32.totalorder %v700, 21
    %vm735 = vmand %vm703, %vm719
    %vm736 = vmand %vm704, %vm720
    %vm737 = vmand %vm705, %vm721
    %vm738 = vmand %vm706, %vm722
    %vm739 = vmand %vm707, %vm723
    %vm740 = vmand %vm708, %vm724
    %vm741 = vmand %vm709, %vm725
    %vm742 = vmand %vm710, %vm726
    %vm743 = vmand %vm711, %vm727
    %vm744 = vmand %vm712, %vm728
    %vm745 = vmand %vm713, %vm729
    %vm746 = vmand %vm714, %vm730
    %vm747 = vmand %vm715, %vm731
    %vm748 = vmand %vm716, %vm732
    %vm749 = vmand %vm717, %vm733
    %vm750 = vmand %vm718, %vm734
    %v751 = vsel %vm735, %v606, -1e+30
    %v752 = vsel %vm736, %v611, -1e+30
    %v753 = vsel %vm737, %v616, -1e+30
    %v754 = vsel %vm738, %v621, -1e+30
    %v755 = vsel %vm739, %v626, -1e+30
    %v756 = vsel %vm740, %v631, -1e+30
    %v757 = vsel %vm741, %v636, -1e+30
    %v758 = vsel %vm742, %v641, -1e+30
    %v759 = vsel %vm743, %v646, -1e+30
    %v760 = vsel %vm744, %v651, -1e+30
    %v761 = vsel %vm745, %v656, -1e+30
    %v762 = vsel %vm746, %v661, -1e+30
    %v763 = vsel %vm747, %v666, -1e+30
    %v764 = vsel %vm748, %v671, -1e+30
    %v765 = vsel %vm749, %v676, -1e+30
    %v766 = vsel %vm750, %v681, -1e+30
    %v767 = vmax.f32 %v751, %v755
    %v768 = vmax.f32 %v752, %v756
    %v769 = vmax.f32 %v753, %v757
    %v770 = vmax.f32 %v754, %v758
    %v771 = vmax.f32 %v767, %v759
    %v772 = vmax.f32 %v768, %v760
    %v773 = vmax.f32 %v769, %v761
    %v774 = vmax.f32 %v770, %v762
    %v775 = vmax.f32 %v771, %v763
    %v776 = vmax.f32 %v772, %v764
    %v777 = vmax.f32 %v773, %v765
    %v778 = vmax.f32 %v774, %v766
    %v779 = vmax.f32 %v775, %v776
    %v780 = vmax.f32 %v777, %v778
    %v781 = vmax.f32 %v779, %v780
    %v782 = vrot.slane %v781, 4
    %v783 = vmax.f32 %v781, %v782
    %v784 = vrot.slane %v783, 2
    %v785 = vmax.f32 %v783, %v784
    %v786 = vrot.slane %v785, 1
    %v787 = vmax.f32 %v785, %v786
    %v788 = vsub.f32 1.0, %v787
    %789 = vst [vmem:[#allocation6] sm:$0x1] %v788
    // Predicated region
    $region10: #{tpu_custom_call.1} parent=1 // pred_check
      _
    $region11: #{tpu_custom_call.1} parent=1 // pred_check_branch
      %791 = sbr.rel (0) target = $region13
    $region12: #{tpu_custom_call.1} parent=1 // pred_region
      %s793 = ssub.s32 8192, 8192
      %794 = vsyncadd [#allocation4], %s793
      %s795 = sshll.u32 [#allocation5], 4
      %s796 = int_to_ptr.vmem [resolvable:$true] %s795
      %801 = dma.vmem_to_hbm [thread:$0]  %s796, 8192, %s1, [#allocation4], 512, 512, 32
    $region13: #{tpu_custom_call.1} parent=1 // pred_fallthru
      _
    // Predicated region
    $region14: #{tpu_custom_call.1} parent=1 // pred_check
      _
    $region15: #{tpu_custom_call.1} parent=1 // pred_check_branch
      %803 = sbr.rel (0) target = $region17
    $region16: #{tpu_custom_call.1} parent=1 // pred_region
      %s805 = ssub.s32 16, 16
      %806 = vsyncadd [#allocation7], %s805
      %s808 = sshll.u32 [#allocation6], 4
      %s809 = int_to_ptr.vmem [resolvable:$true] %s808
      %811 = dma.vmem_to_hbm [thread:$0]  %s809, 16, %s2, [#allocation7]
    $region17: #{tpu_custom_call.1} parent=1 // pred_fallthru
      _
    // Predicated region
    $region18: #{tpu_custom_call.1} parent=1 // pred_check
      _
    $region19: #{tpu_custom_call.1} parent=1 // pred_check_branch
      %813 = sbr.rel (0) target = $region21
    $region20: #{tpu_custom_call.1} parent=1 // pred_region
      %814 = dma.done [#allocation4], 8192
    $region21: #{tpu_custom_call.1} parent=1 // pred_fallthru
      _
    // Predicated region
    $region22: #{tpu_custom_call.1} parent=1 // pred_check
      _
    $region23: #{tpu_custom_call.1} parent=1 // pred_check_branch
      %816 = sbr.rel (0) target = $region25
    $region24: #{tpu_custom_call.1} parent=1 // pred_region
      %817 = dma.done [#allocation7], 16
    $region25: #{tpu_custom_call.1} parent=1 // pred_fallthru
      _
    %818 = vsyncpa [#allocation3], 1
    %819 = vsyncpa [#allocation4], 1
    %820 = vsyncpa [#allocation7], 1

</llo_original>
